<compile_context>
chip_gen: v5e
topology: v5e:2x2
jax: 0.10.0
libtpu: 0.0.40
codegen_flags: <defaults>
</compile_context>

<pallas_src>
import jax
import jax.numpy as jnp
from jax.experimental import pallas as pl
from jax.experimental.pallas import tpu as pltpu

HIDDEN = 64
OUT_PAD = 128        # lane-dense padded output width (multiple of 128)
MAX_TILE_B = 1024    # batch rows per grid step (knee of the tile-size sweep)


def _round_up(x, m):
    return (x + m - 1) // m * m


def value_net_kernel(x_ref, w1_ref, b1_ref, w2_ref, b2_ref, w3_ref, b3_ref,
                     out_ref):
    # Layer 1: Linear(in_dim -> 64) + ReLU.  bf16 x bf16 -> f32 accumulate.
    h = jnp.dot(x_ref[...], w1_ref[...], preferred_element_type=jnp.float32)
    h = jnp.maximum(h + b1_ref[...], 0.0)          # bias + ReLU in f32

    # Layer 2: Linear(64 -> 64) + ReLU.
    h = jnp.dot(h.astype(jnp.bfloat16), w2_ref[...],
                preferred_element_type=jnp.float32)
    h = jnp.maximum(h + b2_ref[...], 0.0)

    # Layer 3: Linear(64 -> out_dim), no activation.  Output columns are
    # zero-padded to OUT_PAD so the store is a full 128-lane vst.
    y = jnp.dot(h.astype(jnp.bfloat16), w3_ref[...],
                preferred_element_type=jnp.float32)
    out_ref[...] = (y + b3_ref[...]).astype(out_ref.dtype)


def value_network_forward(x, params):
    """x: [batch, in_dim] float32. params: dict of w1,b1,w2,b2,w3,b3 (f32)."""
    batch, in_dim = x.shape
    out_dim = params["w3"].shape[1]

    # --- batch tiling (tile is a multiple of 16 -> safe for bf16/f32 tiles) ---
    tile_b = min(MAX_TILE_B, _round_up(batch, 16))
    padded_batch = _round_up(batch, tile_b)
    grid = (padded_batch // tile_b,)

    # --- wrapper-side dtype / layout plumbing (no extra compute in-kernel) ---
    x_bf16 = x.astype(jnp.bfloat16)
    if padded_batch != batch:
        x_bf16 = jnp.pad(x_bf16, ((0, padded_batch - batch), (0, 0)))

    w1 = params["w1"].astype(jnp.bfloat16)
    w2 = params["w2"].astype(jnp.bfloat16)
    w3 = jnp.pad(params["w3"].astype(jnp.bfloat16),
                 ((0, 0), (0, OUT_PAD - out_dim)))          # lane-dense pad
    b1 = params["b1"].astype(jnp.float32)
    b2 = params["b2"].astype(jnp.float32)
    b3 = jnp.pad(params["b3"].astype(jnp.float32),
                 ((0, 0), (0, OUT_PAD - out_dim)))

    # Weights/biases: constant block index -> stay resident in VMEM.
    resident = lambda shape: pl.BlockSpec(shape, lambda i: (0, 0))

    flops = 2 * padded_batch * (in_dim * HIDDEN + HIDDEN * HIDDEN
                                + HIDDEN * OUT_PAD)
    bytes_accessed = (x_bf16.size * 2
                      + (w1.size + w2.size + w3.size) * 2
                      + (b1.size + b2.size + b3.size) * 4
                      + padded_batch * OUT_PAD * 4)

    out_padded = pl.pallas_call(
        value_net_kernel,
        out_shape=jax.ShapeDtypeStruct((padded_batch, OUT_PAD), jnp.float32),
        grid=grid,
        in_specs=[
            # If profiling ever shows exposed x-DMA on v5e, bump this spec to
            # pipeline_mode=pl.Buffered(3).
            pl.BlockSpec((tile_b, in_dim), lambda i: (i, 0)),
            resident(w1.shape), resident(b1.shape),
            resident(w2.shape), resident(b2.shape),
            resident(w3.shape), resident(b3.shape),
        ],
        out_specs=pl.BlockSpec((tile_b, OUT_PAD), lambda i: (i, 0)),
        compiler_params=pltpu.CompilerParams(
            dimension_semantics=("parallel",)),
        cost_estimate=pl.CostEstimate(flops=flops, transcendentals=0,
                                      bytes_accessed=bytes_accessed),
    )(x_bf16, w1, b1, w2, b2, w3, b3)

    # Strip batch padding and the lane-density padding.
    return out_padded[:batch, :out_dim]


def init_params(key, in_dim, out_dim, hidden=HIDDEN):
    """Deterministic init matching PyTorch Linear's U(-1/sqrt(fan_in), +)."""
    ks = jax.random.split(key, 6)

    def linear(kw, kb, fan_in, fan_out):
        bound = 1.0 / jnp.sqrt(fan_in)
        w = jax.random.uniform(kw, (fan_in, fan_out), jnp.float32,
                               minval=-bound, maxval=bound)
        b = jax.random.uniform(kb, (1, fan_out), jnp.float32,
                               minval=-bound, maxval=bound)
        return w, b

    w1, b1 = linear(ks[0], ks[1], in_dim, hidden)
    w2, b2 = linear(ks[2], ks[3], hidden, hidden)
    w3, b3 = linear(ks[4], ks[5], hidden, out_dim)
    return {"w1": w1, "b1": b1, "w2": w2, "b2": b2, "w3": w3, "b3": b3}


def reference_forward(x, p):
    """Pure-JAX reference mirroring the kernel's bf16-operand / f32-accumulate
    precision (products of bf16-rounded values, f32 accumulation)."""
    r = lambda a: a.astype(jnp.bfloat16).astype(jnp.float32)
    h = jnp.maximum(r(x) @ r(p["w1"]) + p["b1"], 0.0)
    h = jnp.maximum(r(h) @ r(p["w2"]) + p["b2"], 0.0)
    return r(h) @ r(p["w3"]) + p["b3"]


if __name__ == "__main__":
    key = jax.random.PRNGKey(0)
    k_x, k_x2, k_p = jax.random.split(key, 3)

    in_dim, out_dim = 32, 4
    params = init_params(k_p, in_dim, out_dim)

    # Small primary case (batch=8 -> single padded 16-row tile).
    batch = 8
    x = jax.random.normal(k_x, (batch, in_dim), jnp.float32)
    out = jax.block_until_ready(value_network_forward(x, params))
    ref = reference_forward(x, params)
    assert out.shape == (batch, out_dim)
    assert jnp.allclose(out, ref, atol=1e-3, rtol=1e-3), "mismatch (batch=8)"

    # Ragged-batch case exercising batch padding / tail handling.
    batch2 = 40
    x2 = jax.random.normal(k_x2, (batch2, in_dim), jnp.float32)
    out2 = jax.block_until_ready(value_network_forward(x2, params))
    ref2 = reference_forward(x2, params)
    assert out2.shape == (batch2, out_dim)
    assert jnp.allclose(out2, ref2, atol=1e-3, rtol=1e-3), "mismatch (batch=40)"

    print("KERNEL_OK")
</pallas_src>

<mosaic_0001>
module attributes {stable_mosaic.version = 11 : i64} {
  func.func @value_net_kernel(%arg0: i32, %arg1: memref<16x32xbf16, #tpu.memory_space<vmem>>, %arg2: memref<32x64xbf16, #tpu.memory_space<vmem>>, %arg3: memref<1x64xf32, #tpu.memory_space<vmem>>, %arg4: memref<64x64xbf16, #tpu.memory_space<vmem>>, %arg5: memref<1x64xf32, #tpu.memory_space<vmem>>, %arg6: memref<64x128xbf16, #tpu.memory_space<vmem>>, %arg7: memref<1x128xf32, #tpu.memory_space<vmem>>, %arg8: memref<16x128xf32, #tpu.memory_space<vmem>>) attributes {dimension_semantics = [#tpu.dimension_semantics<parallel>], iteration_bounds = array<i64: 1>, scalar_prefetch = 0 : i64, scratch_operands = 0 : i64, tpu.core_type = #tpu.core_type<tc>, window_params = [{transform_indices = @transform_0, window_bounds = array<i64: 16, 32>}, {pipeline_mode = #tpu.pipeline_mode<synchronous>, transform_indices = @transform_1, window_bounds = array<i64: 32, 64>}, {pipeline_mode = #tpu.pipeline_mode<synchronous>, transform_indices = @transform_2, window_bounds = array<i64: 1, 64>}, {pipeline_mode = #tpu.pipeline_mode<synchronous>, transform_indices = @transform_3, window_bounds = array<i64: 64, 64>}, {pipeline_mode = #tpu.pipeline_mode<synchronous>, transform_indices = @transform_4, window_bounds = array<i64: 1, 64>}, {pipeline_mode = #tpu.pipeline_mode<synchronous>, transform_indices = @transform_5, window_bounds = array<i64: 64, 128>}, {pipeline_mode = #tpu.pipeline_mode<synchronous>, transform_indices = @transform_6, window_bounds = array<i64: 1, 128>}, {transform_indices = @transform_7, window_bounds = array<i64: 16, 128>}]} {
    %c0 = arith.constant 0 : index
    %c0_0 = arith.constant 0 : index
    %0 = vector.load %arg1[%c0, %c0_0] : memref<16x32xbf16, #tpu.memory_space<vmem>>, vector<16x32xbf16>
    %c0_1 = arith.constant 0 : index
    %c0_2 = arith.constant 0 : index
    %1 = vector.load %arg2[%c0_1, %c0_2] : memref<32x64xbf16, #tpu.memory_space<vmem>>, vector<32x64xbf16>
    %cst = arith.constant dense<0.000000e+00> : vector<16x64xf32>
    %2 = tpu.matmul %0, %1, %cst {dimension_numbers = #tpu.dot_dimension_numbers<[1], [0], [0], [1], [0, 0, 1, 1], [], []>} : vector<16x32xbf16>, vector<32x64xbf16>, vector<16x64xf32> -> vector<16x64xf32>
    %c0_3 = arith.constant 0 : index
    %c0_4 = arith.constant 0 : index
    %3 = vector.load %arg3[%c0_3, %c0_4] : memref<1x64xf32, #tpu.memory_space<vmem>>, vector<1x64xf32>
    %4 = vector.broadcast %3 : vector<1x64xf32> to vector<16x64xf32>
    %5 = arith.addf %2, %4 : vector<16x64xf32>
    %cst_5 = arith.constant 0.000000e+00 : f32
    %6 = vector.broadcast %cst_5 : f32 to vector<16x64xf32>
    %7 = arith.maximumf %5, %6 : vector<16x64xf32>
    %8 = arith.truncf %7 : vector<16x64xf32> to vector<16x64xbf16>
    %c0_6 = arith.constant 0 : index
    %c0_7 = arith.constant 0 : index
    %9 = vector.load %arg4[%c0_6, %c0_7] : memref<64x64xbf16, #tpu.memory_space<vmem>>, vector<64x64xbf16>
    %cst_8 = arith.constant dense<0.000000e+00> : vector<16x64xf32>
    %10 = tpu.matmul %8, %9, %cst_8 {dimension_numbers = #tpu.dot_dimension_numbers<[1], [0], [0], [1], [0, 0, 1, 1], [], []>} : vector<16x64xbf16>, vector<64x64xbf16>, vector<16x64xf32> -> vector<16x64xf32>
    %c0_9 = arith.constant 0 : index
    %c0_10 = arith.constant 0 : index
    %11 = vector.load %arg5[%c0_9, %c0_10] : memref<1x64xf32, #tpu.memory_space<vmem>>, vector<1x64xf32>
    %12 = vector.broadcast %11 : vector<1x64xf32> to vector<16x64xf32>
    %13 = arith.addf %10, %12 : vector<16x64xf32>
    %cst_11 = arith.constant 0.000000e+00 : f32
    %14 = vector.broadcast %cst_11 : f32 to vector<16x64xf32>
    %15 = arith.maximumf %13, %14 : vector<16x64xf32>
    %16 = arith.truncf %15 : vector<16x64xf32> to vector<16x64xbf16>
    %c0_12 = arith.constant 0 : index
    %c0_13 = arith.constant 0 : index
    %17 = vector.load %arg6[%c0_12, %c0_13] : memref<64x128xbf16, #tpu.memory_space<vmem>>, vector<64x128xbf16>
    %cst_14 = arith.constant dense<0.000000e+00> : vector<16x128xf32>
    %18 = tpu.matmul %16, %17, %cst_14 {dimension_numbers = #tpu.dot_dimension_numbers<[1], [0], [0], [1], [0, 0, 1, 1], [], []>} : vector<16x64xbf16>, vector<64x128xbf16>, vector<16x128xf32> -> vector<16x128xf32>
    %c0_15 = arith.constant 0 : index
    %c0_16 = arith.constant 0 : index
    %19 = vector.load %arg7[%c0_15, %c0_16] : memref<1x128xf32, #tpu.memory_space<vmem>>, vector<1x128xf32>
    %20 = vector.broadcast %19 : vector<1x128xf32> to vector<16x128xf32>
    %21 = arith.addf %18, %20 : vector<16x128xf32>
    %c0_17 = arith.constant 0 : index
    %c0_18 = arith.constant 0 : index
    %22 = vector.load %arg8[%c0_17, %c0_18] : memref<16x128xf32, #tpu.memory_space<vmem>>, vector<16x128xf32>
    tpu.vector_store %arg8[%c0_17, %c0_18], %21 {strides = array<i32>} : memref<16x128xf32, #tpu.memory_space<vmem>>, vector<16x128xf32>,
    return
  }
  func.func @transform_0(%arg0: i32) -> (i32, i32) {
    %c0_i32 = arith.constant 0 : i32
    %c0_i32_0 = arith.constant 0 : i32
    return %arg0, %c0_i32 : i32, i32
  }
  func.func @transform_1(%arg0: i32) -> (i32, i32) {
    %c0_i32 = arith.constant 0 : i32
    %c0_i32_0 = arith.constant 0 : i32
    %c0_i32_1 = arith.constant 0 : i32
    return %c0_i32, %c0_i32_0 : i32, i32
  }
  func.func @transform_2(%arg0: i32) -> (i32, i32) {
    %c0_i32 = arith.constant 0 : i32
    %c0_i32_0 = arith.constant 0 : i32
    %c0_i32_1 = arith.constant 0 : i32
    return %c0_i32, %c0_i32_0 : i32, i32
  }
  func.func @transform_3(%arg0: i32) -> (i32, i32) {
    %c0_i32 = arith.constant 0 : i32
    %c0_i32_0 = arith.constant 0 : i32
    %c0_i32_1 = arith.constant 0 : i32
    return %c0_i32, %c0_i32_0 : i32, i32
  }
  func.func @transform_4(%arg0: i32) -> (i32, i32) {
    %c0_i32 = arith.constant 0 : i32
    %c0_i32_0 = arith.constant 0 : i32
    %c0_i32_1 = arith.constant 0 : i32
    return %c0_i32, %c0_i32_0 : i32, i32
  }
  func.func @transform_5(%arg0: i32) -> (i32, i32) {
    %c0_i32 = arith.constant 0 : i32
    %c0_i32_0 = arith.constant 0 : i32
    %c0_i32_1 = arith.constant 0 : i32
    return %c0_i32, %c0_i32_0 : i32, i32
  }
  func.func @transform_6(%arg0: i32) -> (i32, i32) {
    %c0_i32 = arith.constant 0 : i32
    %c0_i32_0 = arith.constant 0 : i32
    %c0_i32_1 = arith.constant 0 : i32
    return %c0_i32, %c0_i32_0 : i32, i32
  }
  func.func @transform_7(%arg0: i32) -> (i32, i32) {
    %c0_i32 = arith.constant 0 : i32
    %c0_i32_0 = arith.constant 0 : i32
    return %arg0, %c0_i32 : i32, i32
  }
}

</mosaic_0001>

<llo_original>
// kernel: tpu_custom_call.1
$region0: #{tpu_custom_call.1}
  #allocation0 [shape = 'u32[]', space=smem, size = 0x4, offset = 0x4, fixed_abs, tag = 'smem constant byte address 0x4 - core index']
  #allocation1 [shape = 'u32[72,128]{1,0:T(1,128)}', space=vmem, size = 0x9000, scoped, tag = 'internal scratch']
  %s0 = inlined_call_operand.hbm [shape: bf16[16,32], index: 0, kind: input, shape index: {}]
  %s1 = inlined_call_operand.hbm [shape: bf16[32,64], index: 1, kind: input, shape index: {}]
  %s2 = inlined_call_operand.vmem [shape: f32[1,64], index: 2, kind: input, shape index: {}]
  %s3 = inlined_call_operand.hbm [shape: bf16[64,64], index: 3, kind: input, shape index: {}]
  %s4 = inlined_call_operand.vmem [shape: f32[1,64], index: 4, kind: input, shape index: {}]
  %s5 = inlined_call_operand.hbm [shape: bf16[64,128], index: 5, kind: input, shape index: {}]
  %s6 = inlined_call_operand.vmem [shape: f32[1,128], index: 6, kind: input, shape index: {}]
  %s7 = inlined_call_operand.hbm [shape: f32[16,128], index: 7, kind: output, shape index: {}]
  %s8 = sld [smem:[#allocation0]]
  $region54: #{tpu_custom_call.1} parent=0
    _
  %s10 = ssub.s32 1, %s8
  %s11 = scalar_select 0, %s10, %s8
  $region1: #{tpu_custom_call.1} parent=0
    #allocation2 [shape = 'u8[4096]{0}', space=vmem, size = 0x1000, scoped, tag = 'input window, operand 0, single buffered']
    #allocation3 [shape = 's32[1]{0}', space=sflag, size = 0x4, scoped, tag = 'scoped memory for tpu_custom_call.1']
    #allocation4 [shape = 's32[1]{0}', space=sflag, size = 0x4, scoped, tag = 'scoped memory for tpu_custom_call.1']
    #allocation5 [shape = 'u8[8192]{0}', space=vmem, size = 0x2000, scoped, tag = 'input window, operand 1, single buffered']
    #allocation6 [shape = 's32[1]{0}', space=sflag, size = 0x4, scoped, tag = 'scoped memory for tpu_custom_call.1']
    #allocation7 [shape = 'u8[16384]{0}', space=vmem, size = 0x4000, scoped, tag = 'input window, operand 3, single buffered']
    #allocation8 [shape = 'u8[16384]{0}', space=vmem, size = 0x4000, scoped, tag = 'input window, operand 5, single buffered']
    #allocation9 [shape = 's32[1]{0}', space=sflag, size = 0x4, scoped, tag = 'scoped memory for tpu_custom_call.1']
    #allocation10 [shape = 'u8[8192]{0}', space=vmem, size = 0x2000, scoped, tag = 'output window, operand 0, single buffered']
    %12 = vsyncpa [#allocation3], 0
    %13 = vsyncpa [#allocation6], 0
    %14 = vsyncpa [#allocation9], 0
    %15 = vsyncpa [#allocation4], 0
    // Predicated region
    $region2: #{tpu_custom_call.1} parent=1 // pred_check
      _
    $region3: #{tpu_custom_call.1} parent=1 // pred_check_branch
      %17 = sbr.rel (0) target = $region5
    $region4: #{tpu_custom_call.1} parent=1 // pred_region
      %19 = vsyncadd [#allocation3], 0
      %s20 = sshll.u32 %s0, 4
      %s21 = int_to_ptr.hbm [resolvable:$true] %s20
      %s22 = sshll.u32 [#allocation2], 4
      %s23 = int_to_ptr.vmem [resolvable:$true] %s22
      %28 = dma.hbm_to_vmem [thread:$0]  %s21, 128, %s23, [#allocation3], 64, 64, 4
    $region5: #{tpu_custom_call.1} parent=1 // pred_fallthru
      _
    // Predicated region
    $region6: #{tpu_custom_call.1} parent=1 // pred_check
      _
    $region7: #{tpu_custom_call.1} parent=1 // pred_check_branch
      %30 = sbr.rel (0) target = $region9
    $region8: #{tpu_custom_call.1} parent=1 // pred_region
      %32 = vsyncadd [#allocation6], 0
      %s33 = sshll.u32 %s1, 4
      %s34 = int_to_ptr.hbm [resolvable:$true] %s33
      %s35 = sshll.u32 [#allocation5], 4
      %s36 = int_to_ptr.vmem [resolvable:$true] %s35
      %41 = dma.hbm_to_vmem [thread:$0]  %s34, 256, %s36, [#allocation6], 64, 64, 4
    $region9: #{tpu_custom_call.1} parent=1 // pred_fallthru
      _
    // Predicated region
    $region10: #{tpu_custom_call.1} parent=1 // pred_check
      _
    $region11: #{tpu_custom_call.1} parent=1 // pred_check_branch
      %43 = sbr.rel (0) target = $region13
    $region12: #{tpu_custom_call.1} parent=1 // pred_region
      _
    $region13: #{tpu_custom_call.1} parent=1 // pred_fallthru
      _
    // Predicated region
    $region14: #{tpu_custom_call.1} parent=1 // pred_check
      _
    $region15: #{tpu_custom_call.1} parent=1 // pred_check_branch
      %45 = sbr.rel (0) target = $region17
    $region16: #{tpu_custom_call.1} parent=1 // pred_region
      %47 = vsyncadd [#allocation6], 0
      %s48 = sshll.u32 %s3, 4
      %s49 = int_to_ptr.hbm [resolvable:$true] %s48
      %s50 = sshll.u32 [#allocation7], 4
      %s51 = int_to_ptr.vmem [resolvable:$true] %s50
      %56 = dma.hbm_to_vmem [thread:$0]  %s49, 512, %s51, [#allocation6], 64, 64, 4
    $region17: #{tpu_custom_call.1} parent=1 // pred_fallthru
      _
    // Predicated region
    $region18: #{tpu_custom_call.1} parent=1 // pred_check
      _
    $region19: #{tpu_custom_call.1} parent=1 // pred_check_branch
      %58 = sbr.rel (0) target = $region21
    $region20: #{tpu_custom_call.1} parent=1 // pred_region
      _
    $region21: #{tpu_custom_call.1} parent=1 // pred_fallthru
      _
    // Predicated region
    $region22: #{tpu_custom_call.1} parent=1 // pred_check
      _
    $region23: #{tpu_custom_call.1} parent=1 // pred_check_branch
      %60 = sbr.rel (0) target = $region25
    $region24: #{tpu_custom_call.1} parent=1 // pred_region
      %62 = vsyncadd [#allocation9], 0
      %s63 = sshll.u32 %s5, 4
      %s64 = int_to_ptr.hbm [resolvable:$true] %s63
      %s65 = sshll.u32 [#allocation8], 4
      %s66 = int_to_ptr.vmem [resolvable:$true] %s65
      %71 = dma.hbm_to_vmem [thread:$0]  %s64, 512, %s66, [#allocation9], 64, 64, 4
    $region25: #{tpu_custom_call.1} parent=1 // pred_fallthru
      _
    // Predicated region
    $region26: #{tpu_custom_call.1} parent=1 // pred_check
      _
    $region27: #{tpu_custom_call.1} parent=1 // pred_check_branch
      %73 = sbr.rel (0) target = $region29
    $region28: #{tpu_custom_call.1} parent=1 // pred_region
      _
    $region29: #{tpu_custom_call.1} parent=1 // pred_fallthru
      _
    // Predicated region
    $region30: #{tpu_custom_call.1} parent=1 // pred_check
      _
    $region31: #{tpu_custom_call.1} parent=1 // pred_check_branch
      %75 = sbr.rel (0) target = $region33
    $region32: #{tpu_custom_call.1} parent=1 // pred_region
      %77 = dma.done [#allocation3], 128
    $region33: #{tpu_custom_call.1} parent=1 // pred_fallthru
      _
    // Predicated region
    $region34: #{tpu_custom_call.1} parent=1 // pred_check
      _
    $region35: #{tpu_custom_call.1} parent=1 // pred_check_branch
      %79 = sbr.rel (0) target = $region37
    $region36: #{tpu_custom_call.1} parent=1 // pred_region
      %81 = dma.done [#allocation6], 256
    $region37: #{tpu_custom_call.1} parent=1 // pred_fallthru
      _
    // Predicated region
    $region38: #{tpu_custom_call.1} parent=1 // pred_check
      _
    $region39: #{tpu_custom_call.1} parent=1 // pred_check_branch
      %83 = sbr.rel (0) target = $region41
    $region40: #{tpu_custom_call.1} parent=1 // pred_region
      %85 = dma.done [#allocation6], 512
    $region41: #{tpu_custom_call.1} parent=1 // pred_fallthru
      _
    // Predicated region
    $region42: #{tpu_custom_call.1} parent=1 // pred_check
      _
    $region43: #{tpu_custom_call.1} parent=1 // pred_check_branch
      %87 = sbr.rel (0) target = $region45
    $region44: #{tpu_custom_call.1} parent=1 // pred_region
      %89 = dma.done [#allocation9], 512
    $region45: #{tpu_custom_call.1} parent=1 // pred_fallthru
      _
    %v91 = vld [vmem:[#allocation2] sm:$0xf]
    %v92 = vld [vmem:[#allocation2 + $0x4] sm:$0xf]
    %v93 = vld [vmem:[#allocation5] sm:$0xf]
    %v94 = vld [vmem:[#allocation5 + $0x4] sm:$0xf]
    %v95 = vld [vmem:[#allocation5 + $0x8] sm:$0xf]
    %v96 = vld [vmem:[#allocation5 + $0xc] sm:$0xf]
    %v97 = vld [vmem:[%s2] sm:$0x1]
    %v99 = vperm.slane %v97, 0
    %v103 = vunpack.c.l.b16 %v91
    %v104 = vunpack.c.l.b16 %v92
    %v105 = vpack.c.b16 %v104, %v103
    %v110 = vunpack.c.l.b16 %v93
    %v111 = vunpack.c.l.b16 %v94
    %v112 = vunpack.c.l.b16 %v95
    %v113 = vunpack.c.l.b16 %v96
    %v114 = vpack.c.b16 %v111, %v110
    %v115 = vpack.c.b16 %v113, %v112
    %vm118 = vcmask 261120
    %v120 = vsel %vm118, %v105, 0
    %122 = vmatpush.bf16.msra.mxu0 0
    %123 = vmatpush.bf16.msra.mxu0 0
    %124 = vmatpush.bf16.msra.mxu0 0
    %125 = vmatpush.bf16.msra.mxu0 0
    %126 = vmatpush.bf16.msra.mxu0 0
    %127 = vmatpush.bf16.msra.mxu0 0
    %128 = vmatpush.bf16.msra.mxu0 %v115
    %129 = vmatpush.bf16.msra.mxu0 %v114
    %130 = vmatmul.bf16.gmra.mxu0 %v120
    %v131 = vpop.f32.mrf.mxu0
    %v132 = vadd.f32 %v99, %v131
    %v133 = vpop.f32.mrf.mxu0
    %v134 = vadd.f32 %v99, %v133
    %135 = vdwg.mxu0
    %v136 = vmax.f32 %v132, 0.0
    %v137 = vmax.f32 %v134, 0.0
    %v138 = vpack.c.bf16 %v137, %v136
    %v139 = vld [vmem:[#allocation7] sm:$0xf]
    %v140 = vld [vmem:[#allocation7 + $0x4] sm:$0xf]
    %v141 = vld [vmem:[#allocation7 + $0x8] sm:$0xf]
    %v142 = vld [vmem:[#allocation7 + $0xc] sm:$0xf]
    %v143 = vld [vmem:[#allocation7 + $0x10] sm:$0xf]
    %v144 = vld [vmem:[#allocation7 + $0x14] sm:$0xf]
    %v145 = vld [vmem:[#allocation7 + $0x18] sm:$0xf]
    %v146 = vld [vmem:[#allocation7 + $0x1c] sm:$0xf]
    %v147 = vld [vmem:[%s4] sm:$0x1]
    %v149 = vperm.slane %v147, 0
    %v159 = vunpack.c.l.b16 %v139
    %v160 = vunpack.c.l.b16 %v140
    %v161 = vunpack.c.l.b16 %v141
    %v162 = vunpack.c.l.b16 %v142
    %v163 = vunpack.c.l.b16 %v143
    %v164 = vunpack.c.l.b16 %v144
    %v165 = vunpack.c.l.b16 %v145
    %v166 = vunpack.c.l.b16 %v146
    %v167 = vpack.c.b16 %v160, %v159
    %v168 = vpack.c.b16 %v162, %v161
    %v169 = vpack.c.b16 %v164, %v163
    %v170 = vpack.c.b16 %v166, %v165
    %vm175 = vcmask 523264
    %v177 = vsel %vm175, %v138, 0
    %179 = vmatpush.bf16.msra.mxu0 0
    %180 = vmatpush.bf16.msra.mxu0 0
    %181 = vmatpush.bf16.msra.mxu0 0
    %182 = vmatpush.bf16.msra.mxu0 0
    %183 = vmatpush.bf16.msra.mxu0 %v170
    %184 = vmatpush.bf16.msra.mxu0 %v169
    %185 = vmatpush.bf16.msra.mxu0 %v168
    %186 = vmatpush.bf16.msra.mxu0 %v167
    %187 = vmatmul.bf16.gmra.mxu0 %v177
    %v188 = vpop.f32.mrf.mxu0
    %v189 = vadd.f32 %v149, %v188
    %v190 = vpop.f32.mrf.mxu0
    %v191 = vadd.f32 %v149, %v190
    %192 = vdwg.mxu0
    %v193 = vmax.f32 %v189, 0.0
    %v194 = vmax.f32 %v191, 0.0
    %v195 = vpack.c.bf16 %v194, %v193
    %v196 = vld [vmem:[#allocation8] sm:$0xf]
    %v197 = vld [vmem:[#allocation8 + $0x4] sm:$0xf]
    %v198 = vld [vmem:[#allocation8 + $0x8] sm:$0xf]
    %v199 = vld [vmem:[#allocation8 + $0xc] sm:$0xf]
    %v200 = vld [vmem:[#allocation8 + $0x10] sm:$0xf]
    %v201 = vld [vmem:[#allocation8 + $0x14] sm:$0xf]
    %v202 = vld [vmem:[#allocation8 + $0x18] sm:$0xf]
    %v203 = vld [vmem:[#allocation8 + $0x1c] sm:$0xf]
    %v204 = vld [vmem:[%s6] sm:$0x1]
    %v206 = vperm.slane %v204, 0
    %v216 = vunpack.c.l.b16 %v196
    %v217 = vunpack.c.l.b16 %v197
    %v218 = vunpack.c.l.b16 %v198
    %v219 = vunpack.c.l.b16 %v199
    %v220 = vunpack.c.l.b16 %v200
    %v221 = vunpack.c.l.b16 %v201
    %v222 = vunpack.c.l.b16 %v202
    %v223 = vunpack.c.l.b16 %v203
    %v224 = vpack.c.b16 %v217, %v216
    %v225 = vpack.c.b16 %v219, %v218
    %v226 = vpack.c.b16 %v221, %v220
    %v227 = vpack.c.b16 %v223, %v222
    %v233 = vsel %vm175, %v195, 0
    %235 = vmatpush.bf16.msra.mxu0 0
    %236 = vmatpush.bf16.msra.mxu0 0
    %237 = vmatpush.bf16.msra.mxu0 0
    %238 = vmatpush.bf16.msra.mxu0 0
    %239 = vmatpush.bf16.msra.mxu0 %v227
    %240 = vmatpush.bf16.msra.mxu0 %v226
    %241 = vmatpush.bf16.msra.mxu0 %v225
    %242 = vmatpush.bf16.msra.mxu0 %v224
    %243 = vmatmul.bf16.gmra.mxu0 %v233
    %v244 = vpop.f32.mrf.mxu0
    %v245 = vadd.f32 %v206, %v244
    %v246 = vpop.f32.mrf.mxu0
    %v247 = vadd.f32 %v206, %v246
    %248 = vdwg.mxu0
    %249 = vst [vmem:[#allocation10] sm:$0xff] %v245
    %250 = vst [vmem:[#allocation10 + $0x8] sm:$0xff] %v247
    // Predicated region
    $region46: #{tpu_custom_call.1} parent=1 // pred_check
      _
    $region47: #{tpu_custom_call.1} parent=1 // pred_check_branch
      %252 = sbr.rel (0) target = $region49
    $region48: #{tpu_custom_call.1} parent=1 // pred_region
      %254 = vsyncadd [#allocation4], 0
      %s255 = sshll.u32 [#allocation10], 4
      %s256 = int_to_ptr.vmem [resolvable:$true] %s255
      %s257 = sshll.u32 %s7, 4
      %s258 = int_to_ptr.hbm [resolvable:$true] %s257
      %263 = dma.vmem_to_hbm [thread:$0]  %s256, 256, %s258, [#allocation4], 128, 128, 8
    $region49: #{tpu_custom_call.1} parent=1 // pred_fallthru
      _
    // Predicated region
    $region50: #{tpu_custom_call.1} parent=1 // pred_check
      _
    $region51: #{tpu_custom_call.1} parent=1 // pred_check_branch
      %265 = sbr.rel (0) target = $region53
    $region52: #{tpu_custom_call.1} parent=1 // pred_region
      %267 = dma.done [#allocation4], 256
    $region53: #{tpu_custom_call.1} parent=1 // pred_fallthru
      _
    %268 = vsyncpa [#allocation3], 1
    %269 = vsyncpa [#allocation6], 1
    %270 = vsyncpa [#allocation9], 1
    %271 = vsyncpa [#allocation4], 1

</llo_original>
